<compile_context>
chip_gen: v7x
topology: tpu7x:2x2x1
jax: 0.10.0
libtpu: 0.0.40
codegen_flags: <defaults>
</compile_context>

<pallas_src>
import functools

import jax
import jax.numpy as jnp
from jax import lax
from jax.experimental import pallas as pl
from jax.experimental.pallas import tpu as pltpu

BETA_SHIFT = 1.0
EPS = 1e-6
LN_EPS = 1e-5  # nn.LayerNorm default


def _round_up(x, m):
    return ((x + m - 1) // m) * m


def mag_fusion_kernel(text_ref, vid_ref, wcat_ref, whvt_ref, bhv_ref,
                      bv_ref, gamma_ref, beta_ref, out_ref, *, dt_true, dtp):
    text_lp = text_ref[...]                      # (TM, Dtp) bf16, padded cols zero
    vid_lp = vid_ref[...]                        # (TM, Dv)  bf16
    text = text_lp.astype(jnp.float32)           # f32 epilogue copy

    # Single fused matmul over the video operand: [W_hv_video^T | W_v^T], bf16 -> f32 acc.
    cat = jnp.dot(vid_lp, wcat_ref[...], preferred_element_type=jnp.float32)  # (TM, 2*Dtp)

    # weight_v = relu(W_hv([vid ; text]) + b_hv)   (concat folded into 2 matmuls)
    gate_pre = (cat[:, :dtp]
                + jnp.dot(text_lp, whvt_ref[...], preferred_element_type=jnp.float32)
                + bhv_ref[...])
    weight_v = jnp.maximum(gate_pre, 0.0)

    # h_v = weight_v * (W_v(vid) + b_v)
    h_v = weight_v * (cat[:, dtp:] + bv_ref[...])

    # Adaptation gate (padded lane columns are exactly zero -> norms unaffected).
    em_norm = jnp.sqrt(jnp.sum(text * text, axis=-1, keepdims=True))
    hm_norm = jnp.sqrt(jnp.sum(h_v * h_v, axis=-1, keepdims=True))
    hm_norm = jnp.where(hm_norm == 0.0, jnp.ones_like(hm_norm), hm_norm)
    alpha = jnp.minimum(em_norm / (hm_norm + EPS) * BETA_SHIFT, 1.0)  # exact divide

    fused = alpha * h_v + text

    # LayerNorm over the TRUE last dim (padded cols of `fused` are zero, so
    # E[x] / E[x^2] over dt_true are exact).
    inv_d = jnp.float32(1.0 / dt_true)
    mean = jnp.sum(fused, axis=-1, keepdims=True) * inv_d
    mean_sq = jnp.sum(fused * fused, axis=-1, keepdims=True) * inv_d
    var = jnp.maximum(mean_sq - mean * mean, 0.0)
    normed = (fused - mean) * lax.rsqrt(var + LN_EPS)
    out_ref[...] = (normed * gamma_ref[...] + beta_ref[...]).astype(out_ref.dtype)
    # TODO(synk): dropout omitted (eval-mode identity); training parity needs a PRNG mask.


def prepare_mag_params(params, Dt, Dv):
    """One-time weight prep: transpose, fuse video-LHS weights, bf16-cast, zero-pad lanes."""
    Dtp = _round_up(Dt, 128)

    def pad_cols(x, c):
        return jnp.pad(x, ((0, 0), (0, c - x.shape[1])))

    def pad2(x, r, c):
        return jnp.pad(x, ((0, r - x.shape[0]), (0, c - x.shape[1])))

    whv = params["W_hv"]                        # (Dt, Dv + Dt)
    whv_v = whv[:, :Dv].T                       # (Dv, Dt)  video half
    whv_t = whv[:, Dv:].T                       # (Dt, Dt)  text half
    wv = params["W_v"].T                        # (Dv, Dt)

    # Matmul weights in bf16 (MXU), epilogue params stay f32.
    wcat = jnp.concatenate(
        [pad_cols(whv_v, Dtp), pad_cols(wv, Dtp)], axis=1).astype(jnp.bfloat16)  # (Dv, 2*Dtp)
    whvt = pad2(whv_t, Dtp, Dtp).astype(jnp.bfloat16)                            # (Dtp, Dtp)

    row = lambda v: pad_cols(v.reshape(1, Dt).astype(jnp.float32), Dtp)
    return {
        "wcat": wcat,
        "whvt": whvt,
        "b_hv": row(params["b_hv"]),
        "b_v": row(params["b_v"]),
        "gamma": row(params["ln_gamma"]),
        "beta": row(params["ln_beta"]),
    }


@jax.jit
def _mia_forward_impl(text_feats, video_feats, prepped):
    out_dtype = text_feats.dtype                    # return in the caller's dtype
    B, S, Dt = text_feats.shape
    Dv = video_feats.shape[-1]
    N = B * S
    Dtp = prepped["whvt"].shape[0]

    # HBM activations as bf16 (halves DMA traffic); video_feats.float() is
    # subsumed by the bf16 cast.  Column pad only when Dt is not lane-aligned.
    text2d = text_feats.reshape(N, Dt).astype(jnp.bfloat16)
    vid2d = video_feats.reshape(N, Dv).astype(jnp.bfloat16)
    if Dtp != Dt:
        text2d = jnp.pad(text2d, ((0, 0), (0, Dtp - Dt)))

    # Row tile: multiple of 8, capped at 512; no row padding (masked edge block).
    N8 = _round_up(N, 8)
    TM = min(512, N8)
    if N8 >= 16 and pl.cdiv(N, TM) < 2:
        TM = _round_up(pl.cdiv(N8, 2), 8)           # >= 2 grid steps for v7x megacore
    grid = (pl.cdiv(N, TM),)

    row_spec = lambda cols: pl.BlockSpec((TM, cols), lambda i: (i, 0))
    # VMEM-resident, single-buffered weights (constant index_map, fetched once).
    wt_spec = lambda shape: pl.BlockSpec(shape, lambda i: (0, 0),
                                         pipeline_mode=pl.Buffered(1))

    # VMEM budget: 2x-buffered activation tiles + single-buffered weights + margin.
    out_size = jnp.dtype(out_dtype).itemsize
    act_bytes = TM * (Dtp * 2 + Dv * 2 + Dtp * out_size)          # one buffer of in+out tiles
    wt_bytes = (Dv * 2 * Dtp + Dtp * Dtp) * 2 + 4 * Dtp * 4       # weights, counted once
    vmem_limit = int(min(56 * 1024 * 1024, 2 * act_bytes + wt_bytes + (8 << 20)))

    kernel = functools.partial(mag_fusion_kernel, dt_true=Dt, dtp=Dtp)

    out2d = pl.pallas_call(
        kernel,
        out_shape=jax.ShapeDtypeStruct((N, Dtp), out_dtype),
        grid=grid,
        in_specs=[
            row_spec(Dtp),                # text tile (bf16)
            row_spec(Dv),                 # video tile (bf16)
            wt_spec((Dv, 2 * Dtp)),       # fused video-LHS weights (bf16)
            wt_spec((Dtp, Dtp)),          # W_hv text half, transposed (bf16)
            wt_spec((1, Dtp)),            # b_hv
            wt_spec((1, Dtp)),            # b_v
            wt_spec((1, Dtp)),            # LayerNorm gamma
            wt_spec((1, Dtp)),            # LayerNorm beta
        ],
        out_specs=row_spec(Dtp),
        compiler_params=pltpu.CompilerParams(
            dimension_semantics=("parallel",),
            vmem_limit_bytes=vmem_limit,
        ),
    )(text2d, vid2d, prepped["wcat"], prepped["whvt"], prepped["b_hv"],
      prepped["b_v"], prepped["gamma"], prepped["beta"])

    if Dtp != Dt:
        out2d = out2d[:, :Dt]
    return out2d.reshape(B, S, Dt)


def mia_forward(text_feats, video_feats, prepped):
    """MIA.forward (non-'shark' path): MAG fusion of text and video features."""
    # TODO(synk): the 'shark' fusion method (extra commonsense/caption inputs) is not implemented.
    return _mia_forward_impl(text_feats, video_feats, prepped)


def init_params(key, Dt, Dv):
    k1, k2 = jax.random.split(key)
    return {
        "W_hv": jax.random.normal(k1, (Dt, Dv + Dt), jnp.float32) * 0.02,
        "b_hv": jnp.zeros((Dt,), jnp.float32),
        "W_v": jax.random.normal(k2, (Dt, Dv), jnp.float32) * 0.02,
        "b_v": jnp.zeros((Dt,), jnp.float32),
        "ln_gamma": jnp.ones((Dt,), jnp.float32),
        "ln_beta": jnp.zeros((Dt,), jnp.float32),
    }


def _reference(text_feats, video_feats, params):
    """Pure-JAX MAG reference (eval mode, f32) for a correctness spot-check."""
    video_feats = video_feats.astype(jnp.float32)
    text_feats = text_feats.astype(jnp.float32)
    cat = jnp.concatenate([video_feats, text_feats], axis=-1)
    weight_v = jax.nn.relu(cat @ params["W_hv"].T + params["b_hv"])
    h_v = weight_v * (video_feats @ params["W_v"].T + params["b_v"])
    em_norm = jnp.linalg.norm(text_feats, axis=-1, keepdims=True)
    hm_norm = jnp.linalg.norm(h_v, axis=-1, keepdims=True)
    hm_norm = jnp.where(hm_norm == 0.0, 1.0, hm_norm)
    alpha = jnp.minimum(em_norm / (hm_norm + EPS) * BETA_SHIFT, 1.0)
    fused = alpha * h_v + text_feats
    mean = fused.mean(-1, keepdims=True)
    var = ((fused - mean) ** 2).mean(-1, keepdims=True)
    return ((fused - mean) / jnp.sqrt(var + LN_EPS)) * params["ln_gamma"] + params["ln_beta"]


if __name__ == "__main__":
    B, S, Dt, Dv = 2, 8, 32, 16
    key = jax.random.PRNGKey(0)
    k_text, k_vid, k_params = jax.random.split(key, 3)

    text_feats = jax.random.normal(k_text, (B, S, Dt), jnp.float32)
    video_feats = jax.random.normal(k_vid, (B, S, Dv), jnp.float32)
    params = init_params(k_params, Dt, Dv)
    prepped = prepare_mag_params(params, Dt, Dv)   # one-time weight prep

    out = mia_forward(text_feats, video_feats, prepped)
    jax.block_until_ready(out)
    assert out.shape == (B, S, Dt)

    ref = _reference(text_feats, video_feats, params)
    assert jnp.allclose(out.astype(jnp.float32), ref, rtol=2e-2, atol=2e-2), \
        "mismatch vs pure-JAX reference"

    print("KERNEL_OK")
</pallas_src>

<mosaic_0001>
module attributes {stable_mosaic.version = 11 : i64} {
  func.func @mag_fusion_kernel(%arg0: i32, %arg1: memref<8x128xbf16, #tpu.memory_space<vmem>>, %arg2: memref<8x16xbf16, #tpu.memory_space<vmem>>, %arg3: memref<16x256xbf16, #tpu.memory_space<vmem>>, %arg4: memref<128x128xbf16, #tpu.memory_space<vmem>>, %arg5: memref<1x128xf32, #tpu.memory_space<vmem>>, %arg6: memref<1x128xf32, #tpu.memory_space<vmem>>, %arg7: memref<1x128xf32, #tpu.memory_space<vmem>>, %arg8: memref<1x128xf32, #tpu.memory_space<vmem>>, %arg9: memref<8x128xf32, #tpu.memory_space<vmem>>) attributes {dimension_semantics = [#tpu.dimension_semantics<parallel>], iteration_bounds = array<i64: 2>, scalar_prefetch = 0 : i64, scratch_operands = 0 : i64, tpu.core_type = #tpu.core_type<tc>, window_params = [{transform_indices = @transform_0, window_bounds = array<i64: 8, 128>}, {transform_indices = @transform_1, window_bounds = array<i64: 8, 16>}, {pipeline_mode = #tpu.pipeline_mode<synchronous>, transform_indices = @transform_2, window_bounds = array<i64: 16, 256>}, {pipeline_mode = #tpu.pipeline_mode<synchronous>, transform_indices = @transform_3, window_bounds = array<i64: 128, 128>}, {pipeline_mode = #tpu.pipeline_mode<synchronous>, transform_indices = @transform_4, window_bounds = array<i64: 1, 128>}, {pipeline_mode = #tpu.pipeline_mode<synchronous>, transform_indices = @transform_5, window_bounds = array<i64: 1, 128>}, {pipeline_mode = #tpu.pipeline_mode<synchronous>, transform_indices = @transform_6, window_bounds = array<i64: 1, 128>}, {pipeline_mode = #tpu.pipeline_mode<synchronous>, transform_indices = @transform_7, window_bounds = array<i64: 1, 128>}, {transform_indices = @transform_8, window_bounds = array<i64: 8, 128>}]} {
    %c0 = arith.constant 0 : index
    %c0_0 = arith.constant 0 : index
    %0 = vector.load %arg1[%c0, %c0_0] : memref<8x128xbf16, #tpu.memory_space<vmem>>, vector<8x128xbf16>
    %c0_1 = arith.constant 0 : index
    %c0_2 = arith.constant 0 : index
    %1 = vector.load %arg2[%c0_1, %c0_2] : memref<8x16xbf16, #tpu.memory_space<vmem>>, vector<8x16xbf16>
    %2 = arith.extf %0 : vector<8x128xbf16> to vector<8x128xf32>
    %c0_3 = arith.constant 0 : index
    %c0_4 = arith.constant 0 : index
    %3 = vector.load %arg3[%c0_3, %c0_4] : memref<16x256xbf16, #tpu.memory_space<vmem>>, vector<16x256xbf16>
    %cst = arith.constant dense<0.000000e+00> : vector<8x256xf32>
    %4 = tpu.matmul %1, %3, %cst {dimension_numbers = #tpu.dot_dimension_numbers<[1], [0], [0], [1], [0, 0, 1, 1], [], []>} : vector<8x16xbf16>, vector<16x256xbf16>, vector<8x256xf32> -> vector<8x256xf32>
    %5 = vector.extract_strided_slice %4 {offsets = [0, 0], sizes = [8, 128], strides = [1, 1]} : vector<8x256xf32> to vector<8x128xf32>
    %c0_5 = arith.constant 0 : index
    %c0_6 = arith.constant 0 : index
    %6 = vector.load %arg4[%c0_5, %c0_6] : memref<128x128xbf16, #tpu.memory_space<vmem>>, vector<128x128xbf16>
    %cst_7 = arith.constant dense<0.000000e+00> : vector<8x128xf32>
    %7 = tpu.matmul %0, %6, %cst_7 {dimension_numbers = #tpu.dot_dimension_numbers<[1], [0], [0], [1], [0, 0, 1, 1], [], []>} : vector<8x128xbf16>, vector<128x128xbf16>, vector<8x128xf32> -> vector<8x128xf32>
    %8 = arith.addf %5, %7 : vector<8x128xf32>
    %c0_8 = arith.constant 0 : index
    %c0_9 = arith.constant 0 : index
    %9 = vector.load %arg5[%c0_8, %c0_9] : memref<1x128xf32, #tpu.memory_space<vmem>>, vector<1x128xf32>
    %10 = vector.broadcast %9 : vector<1x128xf32> to vector<8x128xf32>
    %11 = arith.addf %8, %10 : vector<8x128xf32>
    %cst_10 = arith.constant 0.000000e+00 : f32
    %12 = vector.broadcast %cst_10 : f32 to vector<8x128xf32>
    %13 = arith.maximumf %11, %12 : vector<8x128xf32>
    %14 = vector.extract_strided_slice %4 {offsets = [0, 128], sizes = [8, 128], strides = [1, 1]} : vector<8x256xf32> to vector<8x128xf32>
    %c0_11 = arith.constant 0 : index
    %c0_12 = arith.constant 0 : index
    %15 = vector.load %arg6[%c0_11, %c0_12] : memref<1x128xf32, #tpu.memory_space<vmem>>, vector<1x128xf32>
    %16 = vector.broadcast %15 : vector<1x128xf32> to vector<8x128xf32>
    %17 = arith.addf %14, %16 : vector<8x128xf32>
    %18 = arith.mulf %13, %17 : vector<8x128xf32>
    %19 = arith.mulf %2, %2 : vector<8x128xf32>
    %cst_13 = arith.constant dense<0.000000e+00> : vector<8xf32>
    %20 = vector.multi_reduction <add>, %19, %cst_13 [1] : vector<8x128xf32> to vector<8xf32>
    %21 = vector.shape_cast %20 : vector<8xf32> to vector<8x1xf32>
    %22 = math.sqrt %21 : vector<8x1xf32>
    %23 = arith.mulf %18, %18 : vector<8x128xf32>
    %cst_14 = arith.constant dense<0.000000e+00> : vector<8xf32>
    %24 = vector.multi_reduction <add>, %23, %cst_14 [1] : vector<8x128xf32> to vector<8xf32>
    %25 = vector.shape_cast %24 : vector<8xf32> to vector<8x1xf32>
    %26 = math.sqrt %25 : vector<8x1xf32>
    %cst_15 = arith.constant 0.000000e+00 : f32
    %27 = vector.broadcast %cst_15 : f32 to vector<8x1xf32>
    %28 = arith.cmpf oeq, %26, %27 : vector<8x1xf32>
    %cst_16 = arith.constant 1.000000e+00 : f32
    %29 = vector.broadcast %cst_16 : f32 to vector<8x1xf32>
    %30 = arith.select %28, %29, %26 : vector<8x1xi1>, vector<8x1xf32>
    %cst_17 = arith.constant 9.99999997E-7 : f32
    %31 = vector.broadcast %cst_17 : f32 to vector<8x1xf32>
    %32 = arith.addf %30, %31 : vector<8x1xf32>
    %33 = arith.divf %22, %32 : vector<8x1xf32>
    %cst_18 = arith.constant 1.000000e+00 : f32
    %34 = vector.broadcast %cst_18 : f32 to vector<8x1xf32>
    %35 = arith.mulf %33, %34 : vector<8x1xf32>
    %cst_19 = arith.constant 1.000000e+00 : f32
    %36 = vector.broadcast %cst_19 : f32 to vector<8x1xf32>
    %37 = arith.minimumf %35, %36 : vector<8x1xf32>
    %38 = vector.broadcast %37 : vector<8x1xf32> to vector<8x128xf32>
    %39 = arith.mulf %38, %18 : vector<8x128xf32>
    %40 = arith.addf %39, %2 : vector<8x128xf32>
    %cst_20 = arith.constant dense<0.000000e+00> : vector<8xf32>
    %41 = vector.multi_reduction <add>, %40, %cst_20 [1] : vector<8x128xf32> to vector<8xf32>
    %42 = vector.shape_cast %41 : vector<8xf32> to vector<8x1xf32>
    %cst_21 = arith.constant 3.125000e-02 : f32
    %43 = vector.broadcast %cst_21 : f32 to vector<8x1xf32>
    %44 = arith.mulf %42, %43 : vector<8x1xf32>
    %45 = arith.mulf %40, %40 : vector<8x128xf32>
    %cst_22 = arith.constant dense<0.000000e+00> : vector<8xf32>
    %46 = vector.multi_reduction <add>, %45, %cst_22 [1] : vector<8x128xf32> to vector<8xf32>
    %47 = vector.shape_cast %46 : vector<8xf32> to vector<8x1xf32>
    %cst_23 = arith.constant 3.125000e-02 : f32
    %48 = vector.broadcast %cst_23 : f32 to vector<8x1xf32>
    %49 = arith.mulf %47, %48 : vector<8x1xf32>
    %50 = arith.mulf %44, %44 : vector<8x1xf32>
    %51 = arith.subf %49, %50 : vector<8x1xf32>
    %cst_24 = arith.constant 0.000000e+00 : f32
    %52 = vector.broadcast %cst_24 : f32 to vector<8x1xf32>
    %53 = arith.maximumf %51, %52 : vector<8x1xf32>
    %54 = vector.broadcast %44 : vector<8x1xf32> to vector<8x128xf32>
    %55 = arith.subf %40, %54 : vector<8x128xf32>
    %cst_25 = arith.constant 9.99999974E-6 : f32
    %56 = vector.broadcast %cst_25 : f32 to vector<8x1xf32>
    %57 = arith.addf %53, %56 : vector<8x1xf32>
    %58 = math.rsqrt %57 : vector<8x1xf32>
    %59 = vector.broadcast %58 : vector<8x1xf32> to vector<8x128xf32>
    %60 = arith.mulf %55, %59 : vector<8x128xf32>
    %c0_26 = arith.constant 0 : index
    %c0_27 = arith.constant 0 : index
    %61 = vector.load %arg7[%c0_26, %c0_27] : memref<1x128xf32, #tpu.memory_space<vmem>>, vector<1x128xf32>
    %62 = vector.broadcast %61 : vector<1x128xf32> to vector<8x128xf32>
    %63 = arith.mulf %60, %62 : vector<8x128xf32>
    %c0_28 = arith.constant 0 : index
    %c0_29 = arith.constant 0 : index
    %64 = vector.load %arg8[%c0_28, %c0_29] : memref<1x128xf32, #tpu.memory_space<vmem>>, vector<1x128xf32>
    %65 = vector.broadcast %64 : vector<1x128xf32> to vector<8x128xf32>
    %66 = arith.addf %63, %65 : vector<8x128xf32>
    %c0_30 = arith.constant 0 : index
    %c0_31 = arith.constant 0 : index
    %67 = vector.load %arg9[%c0_30, %c0_31] : memref<8x128xf32, #tpu.memory_space<vmem>>, vector<8x128xf32>
    tpu.vector_store %arg9[%c0_30, %c0_31], %66 {strides = array<i32>} : memref<8x128xf32, #tpu.memory_space<vmem>>, vector<8x128xf32>,
    return
  }
  func.func @transform_0(%arg0: i32) -> (i32, i32) {
    %c0_i32 = arith.constant 0 : i32
    %c0_i32_0 = arith.constant 0 : i32
    return %arg0, %c0_i32 : i32, i32
  }
  func.func @transform_1(%arg0: i32) -> (i32, i32) {
    %c0_i32 = arith.constant 0 : i32
    %c0_i32_0 = arith.constant 0 : i32
    return %arg0, %c0_i32 : i32, i32
  }
  func.func @transform_2(%arg0: i32) -> (i32, i32) {
    %c0_i32 = arith.constant 0 : i32
    %c0_i32_0 = arith.constant 0 : i32
    %c0_i32_1 = arith.constant 0 : i32
    return %c0_i32, %c0_i32_0 : i32, i32
  }
  func.func @transform_3(%arg0: i32) -> (i32, i32) {
    %c0_i32 = arith.constant 0 : i32
    %c0_i32_0 = arith.constant 0 : i32
    %c0_i32_1 = arith.constant 0 : i32
    return %c0_i32, %c0_i32_0 : i32, i32
  }
  func.func @transform_4(%arg0: i32) -> (i32, i32) {
    %c0_i32 = arith.constant 0 : i32
    %c0_i32_0 = arith.constant 0 : i32
    %c0_i32_1 = arith.constant 0 : i32
    return %c0_i32, %c0_i32_0 : i32, i32
  }
  func.func @transform_5(%arg0: i32) -> (i32, i32) {
    %c0_i32 = arith.constant 0 : i32
    %c0_i32_0 = arith.constant 0 : i32
    %c0_i32_1 = arith.constant 0 : i32
    return %c0_i32, %c0_i32_0 : i32, i32
  }
  func.func @transform_6(%arg0: i32) -> (i32, i32) {
    %c0_i32 = arith.constant 0 : i32
    %c0_i32_0 = arith.constant 0 : i32
    %c0_i32_1 = arith.constant 0 : i32
    return %c0_i32, %c0_i32_0 : i32, i32
  }
  func.func @transform_7(%arg0: i32) -> (i32, i32) {
    %c0_i32 = arith.constant 0 : i32
    %c0_i32_0 = arith.constant 0 : i32
    %c0_i32_1 = arith.constant 0 : i32
    return %c0_i32, %c0_i32_0 : i32, i32
  }
  func.func @transform_8(%arg0: i32) -> (i32, i32) {
    %c0_i32 = arith.constant 0 : i32
    %c0_i32_0 = arith.constant 0 : i32
    return %arg0, %c0_i32 : i32, i32
  }
}

</mosaic_0001>

<llo_original>
// kernel: _mia_forward_impl.1
$region0: #{_mia_forward_impl.1}
  #allocation0 [shape = 'u32[]', space=smem, size = 0x4, offset = 0x4, fixed_abs, tag = 'smem constant byte address 0x4 - core index']
  #allocation1 [shape = 'u32[144,128]{1,0:T(1,128)}', space=vmem, size = 0x12000, scoped, tag = 'internal scratch']
  %s0 = inlined_call_operand.vmem [shape: bf16[16,128], index: 0, kind: input, shape index: {}]
  %s1 = inlined_call_operand.vmem [shape: bf16[16,16], index: 1, kind: input, shape index: {}]
  %s2 = inlined_call_operand.vmem [shape: bf16[16,256], index: 2, kind: input, shape index: {}]
  %s3 = inlined_call_operand.vmem [shape: bf16[128,128], index: 3, kind: input, shape index: {}]
  %s4 = inlined_call_operand.vmem [shape: f32[1,128], index: 4, kind: input, shape index: {}]
  %s5 = inlined_call_operand.vmem [shape: f32[1,128], index: 5, kind: input, shape index: {}]
  %s6 = inlined_call_operand.vmem [shape: f32[1,128], index: 6, kind: input, shape index: {}]
  %s7 = inlined_call_operand.vmem [shape: f32[1,128], index: 7, kind: input, shape index: {}]
  %s8 = inlined_call_operand.vmem [shape: f32[16,128], index: 8, kind: output, shape index: {}]
  %s9 = sld [smem:[#allocation0]]
  $region65: #{_mia_forward_impl.1} parent=0
    _
  %s11 = ssub.s32 1, %s9
  %s12 = scalar_select 0, %s11, %s9
  loop: start=0, step=1, limit=4
  $region2: #{_mia_forward_impl.1} parent=0 // loop_pre_header
    _
  $region3: #{_mia_forward_impl.1} parent=0 // loop_header
    %s14 = sphi 0, %s18
    %p15 = scmp.ge.s32.totalorder %s14, 4
    %s24 = sphi 0, %s26
    %s27 = sphi 0, %s24
    %s28 = sphi 0, %s27
    %s44 = sphi 0, %s28
    %s50 = sphi 0, %s52
    %s53 = sphi 0, %s50
    %s54 = sphi 0, %s53
    %s70 = sphi 0, %s54
    %s74 = sphi 0, %s74
    %s76 = sphi 0, %s74
    %s77 = sphi 0, %s76
    %s91 = sphi 0, %s77
    %s95 = sphi 0, %s95
    %s97 = sphi 0, %s95
    %s98 = sphi 0, %s97
    %s112 = sphi 0, %s98
    %s116 = sphi 0, %s116
    %s118 = sphi 0, %s116
    %s119 = sphi 0, %s118
    %s133 = sphi 0, %s119
    %s137 = sphi 0, %s137
    %s139 = sphi 0, %s137
    %s140 = sphi 0, %s139
    %s154 = sphi 0, %s140
    %s158 = sphi 0, %s158
    %s160 = sphi 0, %s158
    %s161 = sphi 0, %s160
    %s175 = sphi 0, %s161
    %s179 = sphi 0, %s179
    %s181 = sphi 0, %s179
    %s182 = sphi 0, %s181
    %s196 = sphi 0, %s182
    %s202 = sphi 0, %s204
    %s205 = sphi 0, %s202
    %s206 = sphi 0, %s205
    %s222 = sphi 0, %s206
  $region4: #{_mia_forward_impl.1} parent=0 // loop_header_branch
    %17 = sbr.rel (%p15) target = $region8
  $region5: #{_mia_forward_impl.1} parent=0 // loop_body
    %s19 = ssub.s32 %s14, 1
    %s20 = ssub.s32 %s14, 2
    %s21 = sadd.s32 %s14, 1
    %s22 = ssub.s32 %s14, %s21
    %p23 = scmp.eq.s32.totalorder %s22, 0
    %s25 = sadd.s32 %s24, 1
    %s26 = scalar_select %p23, %s24, %s25
    %p29 = pneg %p23
    %p30 = scmp.eq.s32.totalorder %s14, 1
    %p31 = por %p29, %p30
    %p32 = scmp.ne.s32.totalorder %s24, %s27
    %p33 = scmp.eq.s32.totalorder %s14, 0
    %p34 = por %p32, %p33
    %p35 = scmp.ne.s32.totalorder %s24, %s27
    %p36 = scmp.eq.s32.totalorder %s19, 1
    %p37 = por %p35, %p36
    %p38 = scmp.ne.s32.totalorder %s27, %s28
    %p39 = scmp.eq.s32.totalorder %s19, 0
    %p40 = por %p38, %p39
    %p41 = scmp.ne.s32.totalorder %s27, %s28
    %p42 = scmp.eq.s32.totalorder %s20, 1
    %p43 = por %p41, %p42
    %p45 = scmp.ne.s32.totalorder %s28, %s44
    %p46 = scmp.eq.s32.totalorder %s20, 0
    %p47 = por %p45, %p46
    %s48 = ssub.s32 %s14, %s21
    %p49 = scmp.eq.s32.totalorder %s48, 0
    %s51 = sadd.s32 %s50, 1
    %s52 = scalar_select %p49, %s50, %s51
    %p55 = pneg %p49
    %p56 = scmp.eq.s32.totalorder %s14, 1
    %p57 = por %p55, %p56
    %p58 = scmp.ne.s32.totalorder %s50, %s53
    %p59 = scmp.eq.s32.totalorder %s14, 0
    %p60 = por %p58, %p59
    %p61 = scmp.ne.s32.totalorder %s50, %s53
    %p62 = scmp.eq.s32.totalorder %s19, 1
    %p63 = por %p61, %p62
    %p64 = scmp.ne.s32.totalorder %s53, %s54
    %p65 = scmp.eq.s32.totalorder %s19, 0
    %p66 = por %p64, %p65
    %p67 = scmp.ne.s32.totalorder %s53, %s54
    %p68 = scmp.eq.s32.totalorder %s20, 1
    %p69 = por %p67, %p68
    %p71 = scmp.ne.s32.totalorder %s54, %s70
    %p72 = scmp.eq.s32.totalorder %s20, 0
    %p73 = por %p71, %p72
    %s75 = sadd.s32 %s74, 1
    %p78 = scmp.eq.s32.totalorder %s14, 1
    %p79 = scmp.ne.s32.totalorder %s74, %s76
    %p80 = scmp.eq.s32.totalorder %s14, 0
    %p81 = por %p79, %p80
    %p82 = scmp.ne.s32.totalorder %s74, %s76
    %p83 = scmp.eq.s32.totalorder %s19, 1
    %p84 = por %p82, %p83
    %p85 = scmp.ne.s32.totalorder %s76, %s77
    %p86 = scmp.eq.s32.totalorder %s19, 0
    %p87 = por %p85, %p86
    %p88 = scmp.ne.s32.totalorder %s76, %s77
    %p89 = scmp.eq.s32.totalorder %s20, 1
    %p90 = por %p88, %p89
    %p92 = scmp.ne.s32.totalorder %s77, %s91
    %p93 = scmp.eq.s32.totalorder %s20, 0
    %p94 = por %p92, %p93
    %s96 = sadd.s32 %s95, 1
    %p99 = scmp.eq.s32.totalorder %s14, 1
    %p100 = scmp.ne.s32.totalorder %s95, %s97
    %p101 = scmp.eq.s32.totalorder %s14, 0
    %p102 = por %p100, %p101
    %p103 = scmp.ne.s32.totalorder %s95, %s97
    %p104 = scmp.eq.s32.totalorder %s19, 1
    %p105 = por %p103, %p104
    %p106 = scmp.ne.s32.totalorder %s97, %s98
    %p107 = scmp.eq.s32.totalorder %s19, 0
    %p108 = por %p106, %p107
    %p109 = scmp.ne.s32.totalorder %s97, %s98
    %p110 = scmp.eq.s32.totalorder %s20, 1
    %p111 = por %p109, %p110
    %p113 = scmp.ne.s32.totalorder %s98, %s112
    %p114 = scmp.eq.s32.totalorder %s20, 0
    %p115 = por %p113, %p114
    %s117 = sadd.s32 %s116, 1
    %p120 = scmp.eq.s32.totalorder %s14, 1
    %p121 = scmp.ne.s32.totalorder %s116, %s118
    %p122 = scmp.eq.s32.totalorder %s14, 0
    %p123 = por %p121, %p122
    %p124 = scmp.ne.s32.totalorder %s116, %s118
    %p125 = scmp.eq.s32.totalorder %s19, 1
    %p126 = por %p124, %p125
    %p127 = scmp.ne.s32.totalorder %s118, %s119
    %p128 = scmp.eq.s32.totalorder %s19, 0
    %p129 = por %p127, %p128
    %p130 = scmp.ne.s32.totalorder %s118, %s119
    %p131 = scmp.eq.s32.totalorder %s20, 1
    %p132 = por %p130, %p131
    %p134 = scmp.ne.s32.totalorder %s119, %s133
    %p135 = scmp.eq.s32.totalorder %s20, 0
    %p136 = por %p134, %p135
    %s138 = sadd.s32 %s137, 1
    %p141 = scmp.eq.s32.totalorder %s14, 1
    %p142 = scmp.ne.s32.totalorder %s137, %s139
    %p143 = scmp.eq.s32.totalorder %s14, 0
    %p144 = por %p142, %p143
    %p145 = scmp.ne.s32.totalorder %s137, %s139
    %p146 = scmp.eq.s32.totalorder %s19, 1
    %p147 = por %p145, %p146
    %p148 = scmp.ne.s32.totalorder %s139, %s140
    %p149 = scmp.eq.s32.totalorder %s19, 0
    %p150 = por %p148, %p149
    %p151 = scmp.ne.s32.totalorder %s139, %s140
    %p152 = scmp.eq.s32.totalorder %s20, 1
    %p153 = por %p151, %p152
    %p155 = scmp.ne.s32.totalorder %s140, %s154
    %p156 = scmp.eq.s32.totalorder %s20, 0
    %p157 = por %p155, %p156
    %s159 = sadd.s32 %s158, 1
    %p162 = scmp.eq.s32.totalorder %s14, 1
    %p163 = scmp.ne.s32.totalorder %s158, %s160
    %p164 = scmp.eq.s32.totalorder %s14, 0
    %p165 = por %p163, %p164
    %p166 = scmp.ne.s32.totalorder %s158, %s160
    %p167 = scmp.eq.s32.totalorder %s19, 1
    %p168 = por %p166, %p167
    %p169 = scmp.ne.s32.totalorder %s160, %s161
    %p170 = scmp.eq.s32.totalorder %s19, 0
    %p171 = por %p169, %p170
    %p172 = scmp.ne.s32.totalorder %s160, %s161
    %p173 = scmp.eq.s32.totalorder %s20, 1
    %p174 = por %p172, %p173
    %p176 = scmp.ne.s32.totalorder %s161, %s175
    %p177 = scmp.eq.s32.totalorder %s20, 0
    %p178 = por %p176, %p177
    %s180 = sadd.s32 %s179, 1
    %p183 = scmp.eq.s32.totalorder %s14, 1
    %p184 = scmp.ne.s32.totalorder %s179, %s181
    %p185 = scmp.eq.s32.totalorder %s14, 0
    %p186 = por %p184, %p185
    %p187 = scmp.ne.s32.totalorder %s179, %s181
    %p188 = scmp.eq.s32.totalorder %s19, 1
    %p189 = por %p187, %p188
    %p190 = scmp.ne.s32.totalorder %s181, %s182
    %p191 = scmp.eq.s32.totalorder %s19, 0
    %p192 = por %p190, %p191
    %p193 = scmp.ne.s32.totalorder %s181, %s182
    %p194 = scmp.eq.s32.totalorder %s20, 1
    %p195 = por %p193, %p194
    %p197 = scmp.ne.s32.totalorder %s182, %s196
    %p198 = scmp.eq.s32.totalorder %s20, 0
    %p199 = por %p197, %p198
    %s200 = ssub.s32 %s14, %s21
    %p201 = scmp.eq.s32.totalorder %s200, 0
    %s203 = sadd.s32 %s202, 1
    %s204 = scalar_select %p201, %s202, %s203
    %p207 = pneg %p201
    %p208 = scmp.eq.s32.totalorder %s14, 1
    %p209 = por %p207, %p208
    %p210 = scmp.ne.s32.totalorder %s202, %s205
    %p211 = scmp.eq.s32.totalorder %s14, 0
    %p212 = por %p210, %p211
    %p213 = scmp.ne.s32.totalorder %s202, %s205
    %p214 = scmp.eq.s32.totalorder %s19, 1
    %p215 = por %p213, %p214
    %p216 = scmp.ne.s32.totalorder %s205, %s206
    %p217 = scmp.eq.s32.totalorder %s19, 0
    %p218 = por %p216, %p217
    %p219 = scmp.ne.s32.totalorder %s205, %s206
    %p220 = scmp.eq.s32.totalorder %s20, 1
    %p221 = por %p219, %p220
    %p223 = scmp.ne.s32.totalorder %s206, %s222
    %p224 = scmp.eq.s32.totalorder %s20, 0
    %p225 = por %p223, %p224
    %p226 = scmp.le.s32.totalorder 1, %s14
    %p227 = scmp.lt.s32.totalorder %s14, 3
    %p228 = pnand %p226, %p227
    %p229 = pneg %p228
    // Predicated region
    $region9: #{_mia_forward_impl.1} parent=5 // pred_check
      _
    $region10: #{_mia_forward_impl.1} parent=5 // pred_check_branch
      %231 = sbr.rel (%p228) target = $region12
    $region11: #{_mia_forward_impl.1} parent=5 // pred_region
      %s232 = ssub.s32 %s14, 1
      // Predicated region
      $region13: #{_mia_forward_impl.1} parent=11 // pred_check
        %p233 = pneg %p87
      $region14: #{_mia_forward_impl.1} parent=11 // pred_check_branch
        %235 = sbr.rel (%p233) target = $region16
      $region15: #{_mia_forward_impl.1} parent=11 // pred_region
        _
      $region16: #{_mia_forward_impl.1} parent=11 // pred_fallthru
        _
      // Predicated region
      $region17: #{_mia_forward_impl.1} parent=11 // pred_check
        %p236 = pneg %p108
      $region18: #{_mia_forward_impl.1} parent=11 // pred_check_branch
        %238 = sbr.rel (%p236) target = $region20
      $region19: #{_mia_forward_impl.1} parent=11 // pred_region
        _
      $region20: #{_mia_forward_impl.1} parent=11 // pred_fallthru
        _
      // Predicated region
      $region21: #{_mia_forward_impl.1} parent=11 // pred_check
        %p239 = pneg %p129
      $region22: #{_mia_forward_impl.1} parent=11 // pred_check_branch
        %241 = sbr.rel (%p239) target = $region24
      $region23: #{_mia_forward_impl.1} parent=11 // pred_region
        _
      $region24: #{_mia_forward_impl.1} parent=11 // pred_fallthru
        _
      // Predicated region
      $region25: #{_mia_forward_impl.1} parent=11 // pred_check
        %p242 = pneg %p150
      $region26: #{_mia_forward_impl.1} parent=11 // pred_check_branch
        %244 = sbr.rel (%p242) target = $region28
      $region27: #{_mia_forward_impl.1} parent=11 // pred_region
        _
      $region28: #{_mia_forward_impl.1} parent=11 // pred_fallthru
        _
      // Predicated region
      $region29: #{_mia_forward_impl.1} parent=11 // pred_check
        %p245 = pneg %p171
      $region30: #{_mia_forward_impl.1} parent=11 // pred_check_branch
        %247 = sbr.rel (%p245) target = $region32
      $region31: #{_mia_forward_impl.1} parent=11 // pred_region
        _
      $region32: #{_mia_forward_impl.1} parent=11 // pred_fallthru
        _
      // Predicated region
      $region33: #{_mia_forward_impl.1} parent=11 // pred_check
        %p248 = pneg %p192
      $region34: #{_mia_forward_impl.1} parent=11 // pred_check_branch
        %250 = sbr.rel (%p248) target = $region36
      $region35: #{_mia_forward_impl.1} parent=11 // pred_region
        _
      $region36: #{_mia_forward_impl.1} parent=11 // pred_fallthru
        _
    $region12: #{_mia_forward_impl.1} parent=5 // pred_fallthru
      _
    %p251 = scmp.lt.s32.totalorder %s14, 2
    // Predicated region
    $region37: #{_mia_forward_impl.1} parent=5 // pred_check
      %p252 = pneg %p251
    $region38: #{_mia_forward_impl.1} parent=5 // pred_check_branch
      %254 = sbr.rel (%p252) target = $region40
    $region39: #{_mia_forward_impl.1} parent=5 // pred_region
      // Predicated region
      $region41: #{_mia_forward_impl.1} parent=39 // pred_check
        %p255 = pneg %p34
      $region42: #{_mia_forward_impl.1} parent=39 // pred_check_branch
        %257 = sbr.rel (%p255) target = $region44
      $region43: #{_mia_forward_impl.1} parent=39 // pred_region
        %p258 = scmp.lt.s32.totalorder %s14, 1
        %s259 = scalar_select %p258, %s14, 1
        %s260 = smul.addr %s259, 4
        %s261 = scalar_lea.vmem %s0, %s260
      $region44: #{_mia_forward_impl.1} parent=39 // pred_fallthru
        _
      // Predicated region
      $region45: #{_mia_forward_impl.1} parent=39 // pred_check
        %p262 = pneg %p60
      $region46: #{_mia_forward_impl.1} parent=39 // pred_check_branch
        %264 = sbr.rel (%p262) target = $region48
      $region47: #{_mia_forward_impl.1} parent=39 // pred_region
        %p265 = scmp.lt.s32.totalorder %s14, 1
        %s266 = scalar_select %p265, %s14, 1
        %s267 = smul.addr %s266, 4
        %s268 = scalar_lea.vmem %s1, %s267
      $region48: #{_mia_forward_impl.1} parent=39 // pred_fallthru
        _
    $region40: #{_mia_forward_impl.1} parent=5 // pred_fallthru
      _
    %p269 = scmp.le.s32.totalorder 1, %s14
    %p270 = scmp.lt.s32.totalorder %s14, 3
    %p271 = pnand %p269, %p270
    %p272 = pneg %p271
    // Predicated region
    $region49: #{_mia_forward_impl.1} parent=5 // pred_check
      _
    $region50: #{_mia_forward_impl.1} parent=5 // pred_check_branch
      %274 = sbr.rel (%p271) target = $region52
    $region51: #{_mia_forward_impl.1} parent=5 // pred_region
      %s275 = ssub.s32 %s14, 1
      %p276 = scmp.lt.s32.totalorder %s19, 1
      %s277 = scalar_select %p276, %s19, 1
      %s278 = smul.addr %s277, 4
      %s279 = scalar_lea.vmem %s0, %s278
      %p280 = pneg %p40
      %p281 = pneg %p37
      %p282 = scmp.lt.s32.totalorder %s19, 1
      %s283 = scalar_select %p282, %s19, 1
      %s284 = smul.addr %s283, 4
      %s285 = scalar_lea.vmem %s1, %s284
      %p286 = pneg %p66
      %p287 = pneg %p63
      %p288 = pneg %p87
      %p289 = pneg %p84
      %p290 = pneg %p108
      %p291 = pneg %p105
      %p292 = pneg %p129
      %p293 = pneg %p126
      %p294 = pneg %p150
      %p295 = pneg %p147
      %p296 = pneg %p171
      %p297 = pneg %p168
      %p298 = pneg %p192
      %p299 = pneg %p189
      %p300 = pneg %p218
      %p301 = pneg %p215
      %p302 = scmp.lt.s32.totalorder %s19, 1
      %s303 = scalar_select %p302, %s19, 1
      %s304 = smul.addr %s303, 8
      %s305 = scalar_lea.vmem %s8, %s304
      %p306 = scmp.lt.s32.totalorder %s19, 1
      %s307 = scalar_select %p306, %s19, 1
      %s308 = smul.addr %s307, 4
      %s309 = scalar_lea.vmem %s0, %s308
      %p310 = scmp.lt.s32.totalorder %s19, 1
      %s311 = scalar_select %p310, %s19, 1
      %s312 = smul.addr %s311, 4
      %s313 = scalar_lea.vmem %s1, %s312
      %p314 = scmp.lt.s32.totalorder %s19, 1
      %s315 = scalar_select %p314, %s19, 1
      %s316 = smul.addr %s315, 8
      %s317 = scalar_lea.vmem %s8, %s316
      %v319 = vld [vmem:[%s309] sm:$0xf]
      %v320 = vld [vmem:[%s313] sm:$0xf]
      %v321 = vunpack.c.l.bf16 %v319
      %v322 = vld [vmem:[%s2] sm:$0xff]
      %v323 = vld [vmem:[%s2 + $0x8] sm:$0xff]
      %v326 = vunpack.c.l.b16 %v322
      %v327 = vunpack.c.h.b16 %v322
      %v328 = vunpack.c.l.b16 %v323
      %v329 = vunpack.c.h.b16 %v323
      %v330 = vpack.c.b16 %v328, %v326
      %v331 = vpack.c.b16 %v329, %v327
      %vm334 = vcmask 130048
      %v336 = vsel %vm334, %v320, 0
      %338 = vmatprep.subr.bf16.mxu0 %v331
      %339 = vmatpush1.bf16.msra.mxu0 %v330
      %340 = vmatprep.subr.bf16.mxu0 0
      %341 = vmatpush1.bf16.msra.mxu0 0
      %342 = vmatprep.subr.bf16.mxu0 0
      %343 = vmatpush1.bf16.msra.mxu0 0
      %344 = vmatprep.subr.bf16.mxu0 0
      %345 = vmatpush1.bf16.msra.mxu0 0
      %346 = vmatprep.subr.bf16.mxu0 0
      %347 = vmatpush1.bf16.msra.mxu0 0
      %348 = vmatprep.subr.bf16.mxu0 0
      %349 = vmatpush1.bf16.msra.mxu0 0
      %350 = vmatprep.subr.bf16.mxu0 0
      %351 = vmatpush1.bf16.msra.mxu0 0
      %352 = vmatprep.subr.bf16.mxu0 0
      %353 = vmatpush1.bf16.msra.mxu0 0
      %354 = vmatprep.subr.bf16.mxu0 0
      %355 = vmatpush1.bf16.msra.mxu0 0
      %356 = vmatprep.subr.bf16.mxu0 0
      %357 = vmatpush1.bf16.msra.mxu0 0
      %358 = vmatprep.subr.bf16.mxu0 0
      %359 = vmatpush1.bf16.msra.mxu0 0
      %360 = vmatprep.subr.bf16.mxu0 0
      %361 = vmatpush1.bf16.msra.mxu0 0
      %362 = vmatprep.subr.bf16.mxu0 0
      %363 = vmatpush1.bf16.msra.mxu0 0
      %364 = vmatprep.subr.bf16.mxu0 0
      %365 = vmatpush1.bf16.msra.mxu0 0
      %366 = vmatprep.subr.bf16.mxu0 0
      %367 = vmatpush1.bf16.msra.mxu0 0
      %368 = vmatprep.subr.bf16.mxu0 0
      %369 = vmatpush1.bf16.msra.mxu0 0
      %370 = vmatprep.mubr.bf16.mxu0 0
      %371 = vmatmul.mubr.bf16.gmra.mrb[0].mxu0 %v336
      %v372 = vpop.f32.mrb[0].mxu0
      %v373 = vadd.f32 0.0, %v372
      %v374 = vpop.f32.mrb[0].mxu0
      %v375 = vadd.f32 0.0, %v374
      %v376 = vpop.f32.mrb[0].mxu0
      %v377 = vpop.f32.mrb[0].mxu0
      %378 = vdwg.mxu0
      %v379 = vld [vmem:[%s3] sm:$0xf]
      %v380 = vld [vmem:[%s3 + $0x4] sm:$0xf]
      %v381 = vld [vmem:[%s3 + $0x8] sm:$0xf]
      %v382 = vld [vmem:[%s3 + $0xc] sm:$0xf]
      %v383 = vld [vmem:[%s3 + $0x10] sm:$0xf]
      %v384 = vld [vmem:[%s3 + $0x14] sm:$0xf]
      %v385 = vld [vmem:[%s3 + $0x18] sm:$0xf]
      %v386 = vld [vmem:[%s3 + $0x1c] sm:$0xf]
      %v387 = vld [vmem:[%s3 + $0x20] sm:$0xf]
      %v388 = vld [vmem:[%s3 + $0x24] sm:$0xf]
      %v389 = vld [vmem:[%s3 + $0x28] sm:$0xf]
      %v390 = vld [vmem:[%s3 + $0x2c] sm:$0xf]
      %v391 = vld [vmem:[%s3 + $0x30] sm:$0xf]
      %v392 = vld [vmem:[%s3 + $0x34] sm:$0xf]
      %v393 = vld [vmem:[%s3 + $0x38] sm:$0xf]
      %v394 = vld [vmem:[%s3 + $0x3c] sm:$0xf]
      %v411 = vunpack.c.l.b16 %v379
      %v412 = vunpack.c.l.b16 %v380
      %v413 = vunpack.c.l.b16 %v381
      %v414 = vunpack.c.l.b16 %v382
      %v415 = vunpack.c.l.b16 %v383
      %v416 = vunpack.c.l.b16 %v384
      %v417 = vunpack.c.l.b16 %v385
      %v418 = vunpack.c.l.b16 %v386
      %v419 = vunpack.c.l.b16 %v387
      %v420 = vunpack.c.l.b16 %v388
      %v421 = vunpack.c.l.b16 %v389
      %v422 = vunpack.c.l.b16 %v390
      %v423 = vunpack.c.l.b16 %v391
      %v424 = vunpack.c.l.b16 %v392
      %v425 = vunpack.c.l.b16 %v393
      %v426 = vunpack.c.l.b16 %v394
      %v427 = vpack.c.b16 %v412, %v411
      %v428 = vpack.c.b16 %v414, %v413
      %v429 = vpack.c.b16 %v416, %v415
      %v430 = vpack.c.b16 %v418, %v417
      %v431 = vpack.c.b16 %v420, %v419
      %v432 = vpack.c.b16 %v422, %v421
      %v433 = vpack.c.b16 %v424, %v423
      %v434 = vpack.c.b16 %v426, %v425
      %443 = vmatprep.subr.bf16.mxu0 0
      %444 = vmatpush1.bf16.msra.mxu0 %v427
      %445 = vmatprep.subr.bf16.mxu0 0
      %446 = vmatpush1.bf16.msra.mxu0 %v428
      %447 = vmatprep.subr.bf16.mxu0 0
      %448 = vmatpush1.bf16.msra.mxu0 %v429
      %449 = vmatprep.subr.bf16.mxu0 0
      %450 = vmatpush1.bf16.msra.mxu0 %v430
      %451 = vmatprep.subr.bf16.mxu0 0
      %452 = vmatpush1.bf16.msra.mxu0 %v431
      %453 = vmatprep.subr.bf16.mxu0 0
      %454 = vmatpush1.bf16.msra.mxu0 %v432
      %455 = vmatprep.subr.bf16.mxu0 0
      %456 = vmatpush1.bf16.msra.mxu0 %v433
      %457 = vmatprep.subr.bf16.mxu0 0
      %458 = vmatpush1.bf16.msra.mxu0 %v434
      %459 = vmatprep.subr.bf16.mxu0 0
      %460 = vmatpush1.bf16.msra.mxu0 0
      %461 = vmatprep.subr.bf16.mxu0 0
      %462 = vmatpush1.bf16.msra.mxu0 0
      %463 = vmatprep.subr.bf16.mxu0 0
      %464 = vmatpush1.bf16.msra.mxu0 0
      %465 = vmatprep.subr.bf16.mxu0 0
      %466 = vmatpush1.bf16.msra.mxu0 0
      %467 = vmatprep.subr.bf16.mxu0 0
      %468 = vmatpush1.bf16.msra.mxu0 0
      %469 = vmatprep.subr.bf16.mxu0 0
      %470 = vmatpush1.bf16.msra.mxu0 0
      %471 = vmatprep.subr.bf16.mxu0 0
      %472 = vmatpush1.bf16.msra.mxu0 0
      %473 = vmatprep.subr.bf16.mxu0 0
      %474 = vmatpush1.bf16.msra.mxu0 0
      %475 = vmatprep.mubr.bf16.mxu0 0
      %476 = vmatmul.mubr.bf16.gmra.mrb[0].mxu0 %v319
      %v477 = vpop.f32.mrb[0].mxu0
      %v478 = vadd.f32 0.0, %v477
      %v479 = vpop.f32.mrb[0].mxu0
      %v480 = vpop.f32.mrb[0].mxu0
      %v481 = vpop.f32.mrb[0].mxu0
      %482 = vdwg.mxu0
      %v483 = vadd.f32 %v373, %v478
      %v484 = vld [vmem:[%s4] sm:$0x1]
      %v486 = vlaneseq
      %v487 = vshrl.u32 %v486, 7
      %v488 = vsub.s32 0, %v487
      %v489 = vrot.slane %v484, %v488
      %v491 = vadd.f32 %v483, %v489
      %v492 = vmax.f32 %v491, 0.0
      %v493 = vld [vmem:[%s5] sm:$0x1]
      %v495 = vlaneseq
      %v496 = vshrl.u32 %v495, 7
      %v497 = vsub.s32 0, %v496
      %v498 = vrot.slane %v493, %v497
      %v500 = vadd.f32 %v375, %v498
      %v501 = vmul.f32 %v492, %v500
      %v502 = vmul.f32 %v321, %v321
      %503 = vadd.xlane.f32.xlu0 %v502
      %v504 = vpop.xlane.xlu0 %503
      %v505 = vrsqrt.pop %v504
      %v506 = vmul.f32 %v504, %v505
      %vm507 = vcmp.eq.f32.partialorder %v504, inf
      %v508 = vsel %vm507, %v504, %v506
      %vm509 = vcmp.eq.f32.partialorder %v504, 0.0
      %v510 = vand.u32 %v504, 2147483648
      %v511 = vsel %vm509, %v510, %v508
      %v512 = vmul.f32 %v501, %v501
      %513 = vadd.xlane.f32.xlu0 %v512
      %v514 = vpop.xlane.xlu0 %513
      %v515 = vrsqrt.pop %v514
      %v516 = vmul.f32 %v514, %v515
      %vm517 = vcmp.eq.f32.partialorder %v514, inf
      %v518 = vsel %vm517, %v514, %v516
      %vm519 = vcmp.eq.f32.partialorder %v514, 0.0
      %v520 = vand.u32 %v514, 2147483648
      %v521 = vsel %vm519, %v520, %v518
      %vm522 = vcmp.eq.f32.partialorder %v521, 0.0
      %v523 = vsel %vm522, 1.0, %v521
      %v524 = vadd.f32 %v523, 1e-06
      %v525 = vrcp.pop %v524
      %v526 = vmul.f32 %v511, %v525
      %v527 = vmin.f32 %v526, 1.0
      %v528 = vmul.f32 %v527, %v501
      %v529 = vadd.f32 %v528, %v321
      %530 = vadd.xlane.f32.xlu0 %v529
      %v531 = vpop.xlane.xlu0 %530
      %v532 = vmul.f32 %v531, 0.03125
      %v533 = vmul.f32 %v529, %v529
      %534 = vadd.xlane.f32.xlu0 %v533
      %v535 = vpop.xlane.xlu0 %534
      %v536 = vmul.f32 %v535, 0.03125
      %v537 = vmul.f32 %v532, %v532
      %v538 = vsub.f32 %v536, %v537
      %v539 = vmax.f32 %v538, 0.0
      %v540 = vsub.f32 %v529, %v532
      %v541 = vadd.f32 %v539, 1e-05
      %v542 = vrsqrt.pop %v541
      %v543 = vmul.f32 %v540, %v542
      %v544 = vld [vmem:[%s6] sm:$0x1]
      %v546 = vlaneseq
      %v547 = vshrl.u32 %v546, 7
      %v548 = vsub.s32 0, %v547
      %v549 = vrot.slane %v544, %v548
      %v551 = vmul.f32 %v543, %v549
      %v552 = vld [vmem:[%s7] sm:$0x1]
      %v554 = vlaneseq
      %v555 = vshrl.u32 %v554, 7
      %v556 = vsub.s32 0, %v555
      %v557 = vrot.slane %v552, %v556
      %v559 = vadd.f32 %v551, %v557
      %560 = vst [vmem:[%s317] sm:$0xff] %v559
      %p561 = scmp.lt.s32.totalorder %s19, 1
      %s562 = scalar_select %p561, %s19, 1
      %s563 = smul.addr %s562, 8
      %s564 = scalar_lea.vmem %s8, %s563
      // Predicated region
      $region53: #{_mia_forward_impl.1} parent=51 // pred_check
        %p565 = pneg %p215
      $region54: #{_mia_forward_impl.1} parent=51 // pred_check_branch
        %567 = sbr.rel (%p565) target = $region56
      $region55: #{_mia_forward_impl.1} parent=51 // pred_region
        _
      $region56: #{_mia_forward_impl.1} parent=51 // pred_fallthru
        _
    $region52: #{_mia_forward_impl.1} parent=5 // pred_fallthru
      _
    %p568 = scmp.le.s32.totalorder 2, %s14
    // Predicated region
    $region57: #{_mia_forward_impl.1} parent=5 // pred_check
      %p569 = pneg %p568
    $region58: #{_mia_forward_impl.1} parent=5 // pred_check_branch
      %571 = sbr.rel (%p569) target = $region60
    $region59: #{_mia_forward_impl.1} parent=5 // pred_region
      %s572 = ssub.s32 %s14, 2
      // Predicated region
      $region61: #{_mia_forward_impl.1} parent=59 // pred_check
        %p573 = pneg %p221
      $region62: #{_mia_forward_impl.1} parent=59 // pred_check_branch
        %575 = sbr.rel (%p573) target = $region64
      $region63: #{_mia_forward_impl.1} parent=59 // pred_region
        %p576 = scmp.lt.s32.totalorder %s20, 1
        %s577 = scalar_select %p576, %s20, 1
        %s578 = smul.addr %s577, 8
        %s579 = scalar_lea.vmem %s8, %s578
      $region64: #{_mia_forward_impl.1} parent=59 // pred_fallthru
        _
    $region60: #{_mia_forward_impl.1} parent=5 // pred_fallthru
      _
  $region6: #{_mia_forward_impl.1} parent=0 // loop_footer
    %s18 = sadd.s32 1, %s14
  $region7: #{_mia_forward_impl.1} parent=0 // loop_footer_branch
    %13 = sbr.rel target = $region3
  $region8: #{_mia_forward_impl.1} parent=0 // loop_exit
    _

</llo_original>
